<compile_context>
chip_gen: v5e
topology: v5e:2x2
jax: 0.10.0
libtpu: 0.0.40
codegen_flags: <defaults>
</compile_context>

<pallas_src>
import functools

import jax
import jax.numpy as jnp
from jax import lax
from jax.experimental import pallas as pl
from jax.experimental.pallas import tpu as pltpu


def _dice_kernel(out_ref, gt_ref, loss_ref, inter_acc, union_acc, *, batch, tile_b):
    """Grid axis 0 walks batch tiles of the channel-0 slice.

    out_ref / gt_ref : (tile_b, H, W) VMEM blocks (channel dim squeezed by BlockSpec).
    loss_ref         : (1, 1) f32 output, written on the last grid step.
    inter_acc/union_acc : (H, W) f32 VMEM accumulators, persist across steps.
    """
    i = pl.program_id(0)

    @pl.when(i == 0)
    def _init():
        inter_acc[...] = jnp.zeros_like(inter_acc)
        union_acc[...] = jnp.zeros_like(union_acc)

    a = out_ref[...].astype(jnp.float32)   # (tile_b, H, W)
    b = gt_ref[...].astype(jnp.float32)

    if batch % tile_b != 0:
        # Ragged last tile: zero rows past the true batch size.  Zeroing both
        # inputs is neutral for sum(a*b) AND sum(a+b).  (Static Python branch:
        # compiled in only when actually needed.)
        row = lax.broadcasted_iota(jnp.int32, a.shape, 0)
        valid = (i * tile_b + row) < batch
        a = jnp.where(valid, a, 0.0)
        b = jnp.where(valid, b, 0.0)

    # Reduce over the leading batch-tile axis only: pure vreg-wise VPU adds,
    # no cross-lane/sublane (XLU) work in the hot loop; fully hidden under DMA.
    inter_acc[...] += jnp.sum(a * b, axis=0)
    union_acc[...] += jnp.sum(a + b, axis=0)

    @pl.when(i == pl.num_programs(0) - 1)
    def _finalize():
        smooth = jnp.float32(1.0)
        inter = jnp.sum(inter_acc[...], keepdims=True)   # (1, 1): one XLU reduce total
        union = jnp.sum(union_acc[...], keepdims=True)   # (1, 1)
        loss_ref[...] = 1.0 - (inter + smooth) / (union + smooth)


def dice_loss(output, ground_truth, *, target_block_bytes=1 << 20):
    """Dice loss over the channel-0 slice of NCHW `output` / `ground_truth`."""
    assert output.shape == ground_truth.shape
    assert output.ndim == 4, "expects NCHW inputs"
    B, C, H, W = output.shape

    # Pick the batch-tile size so each input block is ~target_block_bytes
    # (>= 0.25 MiB amortizes per-step overhead; 2 inputs x 2 pipeline buffers
    # x 1 MiB = 4 MiB stays far under the default scoped VMEM limit everywhere).
    # Raise vmem_limit_bytes in CompilerParams if sweeping much larger blocks.
    per_image_bytes = max(H * W * output.dtype.itemsize, 1)
    tile_b = int(max(1, min(B, target_block_bytes // per_image_bytes)))
    grid = (pl.cdiv(B, tile_b),)

    kernel = functools.partial(_dice_kernel, batch=B, tile_b=tile_b)

    # Channel dim is squeezed (block size None, index pinned to 0): the DMA only
    # ever touches channel 0, inputs stay in their original HBM dtype/layout.
    in_spec = pl.BlockSpec((tile_b, None, H, W), lambda i: (i, 0, 0, 0))

    loss = pl.pallas_call(
        kernel,
        out_shape=jax.ShapeDtypeStruct((1, 1), jnp.float32),
        grid_spec=pltpu.PrefetchScalarGridSpec(
            num_scalar_prefetch=0,
            grid=grid,
            in_specs=[in_spec, in_spec],
            out_specs=pl.BlockSpec((1, 1), lambda i: (0, 0)),
            scratch_shapes=[
                pltpu.VMEM((H, W), jnp.float32),   # intersection accumulator
                pltpu.VMEM((H, W), jnp.float32),   # union accumulator
            ],
        ),
        compiler_params=pltpu.CompilerParams(
            dimension_semantics=("arbitrary",),    # reduction over batch tiles
        ),
    )(output, ground_truth)
    return loss[0, 0]


def _dice_loss_ref(output, ground_truth):
    a = output[:, 0].reshape(-1).astype(jnp.float32)
    b = ground_truth[:, 0].reshape(-1).astype(jnp.float32)
    inter = jnp.sum(a * b)
    union = jnp.sum(a + b)
    return 1.0 - (inter + 1.0) / (union + 1.0)


if __name__ == "__main__":
    key = jax.random.PRNGKey(0)
    k1, k2 = jax.random.split(key)
    B, C, H, W = 2, 4, 16, 16
    output = jax.random.uniform(k1, (B, C, H, W), dtype=jnp.float32)            # prob-like
    ground_truth = (jax.random.uniform(k2, (B, C, H, W)) > 0.5).astype(jnp.float32)

    loss = jax.block_until_ready(dice_loss(output, ground_truth))
    ref = _dice_loss_ref(output, ground_truth)
    assert jnp.allclose(loss, ref, rtol=1e-5, atol=1e-5), (loss, ref)
    print("KERNEL_OK")
</pallas_src>

<mosaic_0001>
module attributes {stable_mosaic.version = 11 : i64} {
  func.func @_dice_kernel(%arg0: i32, %arg1: memref<2x1x16x16xf32, #tpu.memory_space<vmem>>, %arg2: memref<2x1x16x16xf32, #tpu.memory_space<vmem>>, %arg3: memref<1x1xf32, #tpu.memory_space<vmem>>, %arg4: memref<16x16xf32, #tpu.memory_space<vmem>>, %arg5: memref<16x16xf32, #tpu.memory_space<vmem>>) attributes {dimension_semantics = [#tpu.dimension_semantics<arbitrary>], iteration_bounds = array<i64: 1>, scalar_prefetch = 0 : i64, scratch_operands = 2 : i64, tpu.core_type = #tpu.core_type<tc>, window_params = [{transform_indices = @transform_0, window_bounds = array<i64: 2, 1, 16, 16>}, {transform_indices = @transform_1, window_bounds = array<i64: 2, 1, 16, 16>}, {pipeline_mode = #tpu.pipeline_mode<synchronous>, transform_indices = @transform_2, window_bounds = array<i64: 1, 1>}]} {
    %c0_i32 = arith.constant 0 : i32
    %0 = arith.cmpi eq, %arg0, %c0_i32 : i32
    %1 = arith.extui %0 : i1 to i32
    %c0_i32_0 = arith.constant 0 : i32
    %2 = arith.cmpi ne, %1, %c0_i32_0 : i32
    scf.if %2 {
      %cst_19 = arith.constant 0.000000e+00 : f32
      %20 = vector.broadcast %cst_19 : f32 to vector<16x16xf32>
      %c0_20 = arith.constant 0 : index
      %c0_21 = arith.constant 0 : index
      %21 = vector.load %arg4[%c0_20, %c0_21] : memref<16x16xf32, #tpu.memory_space<vmem>>, vector<16x16xf32>
      tpu.vector_store %arg4[%c0_20, %c0_21], %20 {strides = array<i32>} : memref<16x16xf32, #tpu.memory_space<vmem>>, vector<16x16xf32>,
      %cst_22 = arith.constant 0.000000e+00 : f32
      %22 = vector.broadcast %cst_22 : f32 to vector<16x16xf32>
      %c0_23 = arith.constant 0 : index
      %c0_24 = arith.constant 0 : index
      %23 = vector.load %arg5[%c0_23, %c0_24] : memref<16x16xf32, #tpu.memory_space<vmem>>, vector<16x16xf32>
      tpu.vector_store %arg5[%c0_23, %c0_24], %22 {strides = array<i32>} : memref<16x16xf32, #tpu.memory_space<vmem>>, vector<16x16xf32>,
    } else {
    }
    %c0 = arith.constant 0 : index
    %c0_1 = arith.constant 0 : index
    %c0_2 = arith.constant 0 : index
    %c0_3 = arith.constant 0 : index
    %3 = vector.load %arg1[%c0, %c0_1, %c0_2, %c0_3] : memref<2x1x16x16xf32, #tpu.memory_space<vmem>>, vector<2x1x16x16xf32>
    %4 = vector.shape_cast %3 : vector<2x1x16x16xf32> to vector<2x16x16xf32>
    %c0_4 = arith.constant 0 : index
    %c0_5 = arith.constant 0 : index
    %c0_6 = arith.constant 0 : index
    %c0_7 = arith.constant 0 : index
    %5 = vector.load %arg2[%c0_4, %c0_5, %c0_6, %c0_7] : memref<2x1x16x16xf32, #tpu.memory_space<vmem>>, vector<2x1x16x16xf32>
    %6 = vector.shape_cast %5 : vector<2x1x16x16xf32> to vector<2x16x16xf32>
    %c0_8 = arith.constant 0 : index
    %c0_9 = arith.constant 0 : index
    %7 = vector.load %arg4[%c0_8, %c0_9] : memref<16x16xf32, #tpu.memory_space<vmem>>, vector<16x16xf32>
    %8 = arith.mulf %4, %6 : vector<2x16x16xf32>
    %cst = arith.constant dense<0.000000e+00> : vector<16x16xf32>
    %9 = vector.multi_reduction <add>, %8, %cst [0] : vector<2x16x16xf32> to vector<16x16xf32>
    %10 = arith.addf %7, %9 : vector<16x16xf32>
    %c0_10 = arith.constant 0 : index
    %c0_11 = arith.constant 0 : index
    %11 = vector.load %arg4[%c0_10, %c0_11] : memref<16x16xf32, #tpu.memory_space<vmem>>, vector<16x16xf32>
    tpu.vector_store %arg4[%c0_10, %c0_11], %10 {strides = array<i32>} : memref<16x16xf32, #tpu.memory_space<vmem>>, vector<16x16xf32>,
    %c0_12 = arith.constant 0 : index
    %c0_13 = arith.constant 0 : index
    %12 = vector.load %arg5[%c0_12, %c0_13] : memref<16x16xf32, #tpu.memory_space<vmem>>, vector<16x16xf32>
    %13 = arith.addf %4, %6 : vector<2x16x16xf32>
    %cst_14 = arith.constant dense<0.000000e+00> : vector<16x16xf32>
    %14 = vector.multi_reduction <add>, %13, %cst_14 [0] : vector<2x16x16xf32> to vector<16x16xf32>
    %15 = arith.addf %12, %14 : vector<16x16xf32>
    %c0_15 = arith.constant 0 : index
    %c0_16 = arith.constant 0 : index
    %16 = vector.load %arg5[%c0_15, %c0_16] : memref<16x16xf32, #tpu.memory_space<vmem>>, vector<16x16xf32>
    tpu.vector_store %arg5[%c0_15, %c0_16], %15 {strides = array<i32>} : memref<16x16xf32, #tpu.memory_space<vmem>>, vector<16x16xf32>,
    %c0_i32_17 = arith.constant 0 : i32
    %17 = arith.cmpi eq, %arg0, %c0_i32_17 : i32
    %18 = arith.extui %17 : i1 to i32
    %c0_i32_18 = arith.constant 0 : i32
    %19 = arith.cmpi ne, %18, %c0_i32_18 : i32
    scf.if %19 {
      %c0_19 = arith.constant 0 : index
      %c0_20 = arith.constant 0 : index
      %20 = vector.load %arg4[%c0_19, %c0_20] : memref<16x16xf32, #tpu.memory_space<vmem>>, vector<16x16xf32>
      %21 = vector.shape_cast %20 : vector<16x16xf32> to vector<1x16x16xf32>
      %cst_21 = arith.constant dense<0.000000e+00> : vector<1xf32>
      %22 = vector.multi_reduction <add>, %21, %cst_21 [1, 2] : vector<1x16x16xf32> to vector<1xf32>
      %23 = vector.shape_cast %22 : vector<1xf32> to vector<1x1x1xf32>
      %24 = vector.extract %23[0, 0, 0] : f32 from vector<1x1x1xf32>
      %25 = vector.broadcast %24 : f32 to vector<1x1xf32>
      %c0_22 = arith.constant 0 : index
      %c0_23 = arith.constant 0 : index
      %26 = vector.load %arg5[%c0_22, %c0_23] : memref<16x16xf32, #tpu.memory_space<vmem>>, vector<16x16xf32>
      %27 = vector.shape_cast %26 : vector<16x16xf32> to vector<1x16x16xf32>
      %cst_24 = arith.constant dense<0.000000e+00> : vector<1xf32>
      %28 = vector.multi_reduction <add>, %27, %cst_24 [1, 2] : vector<1x16x16xf32> to vector<1xf32>
      %29 = vector.shape_cast %28 : vector<1xf32> to vector<1x1x1xf32>
      %30 = vector.extract %29[0, 0, 0] : f32 from vector<1x1x1xf32>
      %31 = vector.broadcast %30 : f32 to vector<1x1xf32>
      %cst_25 = arith.constant 1.000000e+00 : f32
      %32 = vector.broadcast %cst_25 : f32 to vector<1x1xf32>
      %33 = arith.addf %25, %32 : vector<1x1xf32>
      %cst_26 = arith.constant 1.000000e+00 : f32
      %34 = vector.broadcast %cst_26 : f32 to vector<1x1xf32>
      %35 = arith.addf %31, %34 : vector<1x1xf32>
      %36 = arith.divf %33, %35 : vector<1x1xf32>
      %cst_27 = arith.constant 1.000000e+00 : f32
      %37 = vector.broadcast %cst_27 : f32 to vector<1x1xf32>
      %38 = arith.subf %37, %36 : vector<1x1xf32>
      %c0_28 = arith.constant 0 : index
      %c0_29 = arith.constant 0 : index
      %39 = vector.load %arg3[%c0_28, %c0_29] : memref<1x1xf32, #tpu.memory_space<vmem>>, vector<1x1xf32>
      tpu.vector_store %arg3[%c0_28, %c0_29], %38 {strides = array<i32>} : memref<1x1xf32, #tpu.memory_space<vmem>>, vector<1x1xf32>,
    } else {
    }
    return
  }
  func.func @transform_0(%arg0: i32) -> (i32, i32, i32, i32) {
    %c0_i32 = arith.constant 0 : i32
    %c0_i32_0 = arith.constant 0 : i32
    %c0_i32_1 = arith.constant 0 : i32
    %c0_i32_2 = arith.constant 0 : i32
    return %arg0, %c0_i32, %c0_i32_0, %c0_i32_1 : i32, i32, i32, i32
  }
  func.func @transform_1(%arg0: i32) -> (i32, i32, i32, i32) {
    %c0_i32 = arith.constant 0 : i32
    %c0_i32_0 = arith.constant 0 : i32
    %c0_i32_1 = arith.constant 0 : i32
    %c0_i32_2 = arith.constant 0 : i32
    return %arg0, %c0_i32, %c0_i32_0, %c0_i32_1 : i32, i32, i32, i32
  }
  func.func @transform_2(%arg0: i32) -> (i32, i32) {
    %c0_i32 = arith.constant 0 : i32
    %c0_i32_0 = arith.constant 0 : i32
    %c0_i32_1 = arith.constant 0 : i32
    return %c0_i32, %c0_i32_0 : i32, i32
  }
}

</mosaic_0001>

<llo_original>
// kernel: tpu_custom_call.1
$region0: #{tpu_custom_call.1}
  #allocation0 [shape = 'u32[]', space=smem, size = 0x4, offset = 0x4, fixed_abs, tag = 'smem constant byte address 0x4 - core index']
  #allocation1 [shape = 'u32[72,128]{1,0:T(1,128)}', space=vmem, size = 0x9000, scoped, tag = 'internal scratch']
  #allocation2 [shape = 'f32[16,16]{1,0:T(8,128)}', space=vmem, size = 0x2000, scoped, tag = 'scratch operand']
  #allocation3 [shape = 'f32[16,16]{1,0:T(8,128)}', space=vmem, size = 0x2000, scoped, tag = 'scratch operand']
  #allocation10 [shape = 's32[]', space=sflag, size = 0x4, offset = 0, fixed_abs, tag = 'sflag constant byte address 0x0 - dummy sync flag']
  #allocation12 [shape = 's32[]', space=sflag, size = 0x4, offset = 0, fixed_abs, tag = 'sflag constant byte address 0x0 - dummy sync flag']
  %s0 = inlined_call_operand.hbm [shape: f32[2,4,16,16], index: 0, kind: input, shape index: {}]
  %s1 = inlined_call_operand.hbm [shape: f32[2,4,16,16], index: 1, kind: input, shape index: {}]
  %s2 = inlined_call_operand.hbm [shape: f32[1,1], index: 2, kind: output, shape index: {}]
  %s3 = sld [smem:[#allocation0]]
  $region34: #{tpu_custom_call.1} parent=0
    _
  %s5 = ssub.s32 1, %s3
  %s6 = scalar_select 0, %s5, %s3
  $region1: #{tpu_custom_call.1} parent=0
    #allocation4 [shape = 'u8[16384]{0}', space=vmem, size = 0x4000, scoped, tag = 'input window, operand 0, single buffered']
    #allocation5 [shape = 's32[1]{0}', space=sflag, size = 0x4, scoped, tag = 'scoped memory for tpu_custom_call.1']
    #allocation6 [shape = 's32[1]{0}', space=sflag, size = 0x4, scoped, tag = 'scoped memory for tpu_custom_call.1']
    #allocation7 [shape = 'u8[16384]{0}', space=vmem, size = 0x4000, scoped, tag = 'input window, operand 1, single buffered']
    #allocation8 [shape = 's32[1]{0}', space=sflag, size = 0x4, scoped, tag = 'scoped memory for tpu_custom_call.1']
    #allocation9 [shape = 'u8[512]{0}', space=vmem, size = 0x400, scoped, tag = 'output window, operand 0, single buffered']
    %7 = vsyncpa [#allocation5], 0
    %8 = vsyncpa [#allocation8], 0
    %9 = vsyncpa [#allocation6], 0
    // Predicated region
    $region2: #{tpu_custom_call.1} parent=1 // pred_check
      _
    $region3: #{tpu_custom_call.1} parent=1 // pred_check_branch
      %11 = sbr.rel (0) target = $region5
    $region4: #{tpu_custom_call.1} parent=1 // pred_region
      #allocation11 [shape = 'u32[6]{0}', space=smem, size = 0x18, scoped, tag = 'DMA stride descriptor']
      %13 = vsyncadd [#allocation5], 0
      %s15 = sshll.u32 1, 14
      %s16 = sxor.u32 4294967295, %s15
      %s18 = sld [smem:[#allocation0]]
      %s19 = sadd.s32 2, %s18
      %s21 = sshll.u32 7, 26
      %s22 = sxor.u32 4294967295, %s21
      %s23 = sand.u32 0, %s22
      %s24 = sshll.u32 %s19, 26
      %s25 = sor.u32 %s23, %s24
      %s26 = sshll.u32 %s0, 4
      %s27 = int_to_ptr.hbm [resolvable:$true] %s26
      %s28 = sshll.u32 [#allocation4], 4
      %s29 = int_to_ptr.vmem [resolvable:$true] %s28
      %35 = sst [smem:[#allocation11]] 1024
      %s36 = scalar_lea.smem [#allocation11], 1
      %37 = sst [smem:[%s36]] 256
      %s38 = scalar_lea.smem [#allocation11], 2
      %39 = sst [smem:[%s38]] 2
      %s40 = scalar_lea.smem [#allocation11], 3
      %41 = sst [smem:[%s40]] 128
      %s42 = scalar_lea.smem [#allocation11], 4
      %43 = sst [smem:[%s42]] 128
      %s44 = scalar_lea.smem [#allocation11], 5
      %45 = sst [smem:[%s44]] 8
      %47 = dma.general %s27, 512, %s29, [#allocation5], [#allocation10], [#allocation11], %s25, 0
    $region5: #{tpu_custom_call.1} parent=1 // pred_fallthru
      _
    // Predicated region
    $region6: #{tpu_custom_call.1} parent=1 // pred_check
      _
    $region7: #{tpu_custom_call.1} parent=1 // pred_check_branch
      %49 = sbr.rel (0) target = $region9
    $region8: #{tpu_custom_call.1} parent=1 // pred_region
      #allocation13 [shape = 'u32[6]{0}', space=smem, size = 0x18, scoped, tag = 'DMA stride descriptor']
      %51 = vsyncadd [#allocation8], 0
      %s53 = sshll.u32 1, 14
      %s54 = sxor.u32 4294967295, %s53
      %s56 = sld [smem:[#allocation0]]
      %s57 = sadd.s32 2, %s56
      %s59 = sshll.u32 7, 26
      %s60 = sxor.u32 4294967295, %s59
      %s61 = sand.u32 0, %s60
      %s62 = sshll.u32 %s57, 26
      %s63 = sor.u32 %s61, %s62
      %s64 = sshll.u32 %s1, 4
      %s65 = int_to_ptr.hbm [resolvable:$true] %s64
      %s66 = sshll.u32 [#allocation7], 4
      %s67 = int_to_ptr.vmem [resolvable:$true] %s66
      %73 = sst [smem:[#allocation13]] 1024
      %s74 = scalar_lea.smem [#allocation13], 1
      %75 = sst [smem:[%s74]] 256
      %s76 = scalar_lea.smem [#allocation13], 2
      %77 = sst [smem:[%s76]] 2
      %s78 = scalar_lea.smem [#allocation13], 3
      %79 = sst [smem:[%s78]] 128
      %s80 = scalar_lea.smem [#allocation13], 4
      %81 = sst [smem:[%s80]] 128
      %s82 = scalar_lea.smem [#allocation13], 5
      %83 = sst [smem:[%s82]] 8
      %85 = dma.general %s65, 512, %s67, [#allocation8], [#allocation12], [#allocation13], %s63, 0
    $region9: #{tpu_custom_call.1} parent=1 // pred_fallthru
      _
    // Predicated region
    $region10: #{tpu_custom_call.1} parent=1 // pred_check
      _
    $region11: #{tpu_custom_call.1} parent=1 // pred_check_branch
      %87 = sbr.rel (0) target = $region13
    $region12: #{tpu_custom_call.1} parent=1 // pred_region
      %89 = dma.done [#allocation5], 512
    $region13: #{tpu_custom_call.1} parent=1 // pred_fallthru
      _
    // Predicated region
    $region14: #{tpu_custom_call.1} parent=1 // pred_check
      _
    $region15: #{tpu_custom_call.1} parent=1 // pred_check_branch
      %91 = sbr.rel (0) target = $region17
    $region16: #{tpu_custom_call.1} parent=1 // pred_region
      %93 = dma.done [#allocation8], 512
    $region17: #{tpu_custom_call.1} parent=1 // pred_fallthru
      _
    %p94 = scmp.eq.s32.totalorder 0, 0
    // Predicated region
    $region18: #{tpu_custom_call.1} parent=1 // pred_check
      %p95 = pneg %p94
    $region19: #{tpu_custom_call.1} parent=1 // pred_check_branch
      %97 = sbr.rel (%p95) target = $region21
    $region20: #{tpu_custom_call.1} parent=1 // pred_region
      %vm98 = vcmask 130048
      %99 = vst.msk [vmem:[#allocation2] sm:$0xff] %vm98, 0.0
      %100 = vst.msk [vmem:[#allocation2 + $0x8] sm:$0xff] %vm98, 0.0
      %101 = vst.msk [vmem:[#allocation3] sm:$0xff] %vm98, 0.0
      %102 = vst.msk [vmem:[#allocation3 + $0x8] sm:$0xff] %vm98, 0.0
    $region21: #{tpu_custom_call.1} parent=1 // pred_fallthru
      _
    %v103 = vld [vmem:[#allocation4] sm:$0xff]
    %v104 = vld [vmem:[#allocation4 + $0x8] sm:$0xff]
    %v105 = vld [vmem:[#allocation4 + $0x10] sm:$0xff]
    %v106 = vld [vmem:[#allocation4 + $0x18] sm:$0xff]
    %v107 = vld [vmem:[#allocation7] sm:$0xff]
    %v108 = vld [vmem:[#allocation7 + $0x8] sm:$0xff]
    %v109 = vld [vmem:[#allocation7 + $0x10] sm:$0xff]
    %v110 = vld [vmem:[#allocation7 + $0x18] sm:$0xff]
    %v111 = vld [vmem:[#allocation2] sm:$0xff]
    %v112 = vld [vmem:[#allocation2 + $0x8] sm:$0xff]
    %v113 = vmul.f32 %v103, %v107
    %v114 = vmul.f32 %v104, %v108
    %v115 = vmul.f32 %v105, %v109
    %v116 = vmul.f32 %v106, %v110
    %vm117 = vcmask 130048
    %v118 = vsel %vm117, %v113, 0.0
    %v119 = vsel %vm117, %v115, 0.0
    %v120 = vadd.f32 %v118, %v119
    %v121 = vsel %vm117, %v114, 0.0
    %v122 = vsel %vm117, %v116, 0.0
    %v123 = vadd.f32 %v121, %v122
    %v124 = vadd.f32 %v111, %v120
    %v125 = vadd.f32 %v112, %v123
    %126 = vst.msk [vmem:[#allocation2] sm:$0xff] %vm117, %v124
    %127 = vst.msk [vmem:[#allocation2 + $0x8] sm:$0xff] %vm117, %v125
    %v128 = vld [vmem:[#allocation3] sm:$0xff]
    %v129 = vld [vmem:[#allocation3 + $0x8] sm:$0xff]
    %v130 = vadd.f32 %v103, %v107
    %v131 = vadd.f32 %v104, %v108
    %v132 = vadd.f32 %v105, %v109
    %v133 = vadd.f32 %v106, %v110
    %v134 = vsel %vm117, %v130, 0.0
    %v135 = vsel %vm117, %v132, 0.0
    %v136 = vadd.f32 %v134, %v135
    %v137 = vsel %vm117, %v131, 0.0
    %v138 = vsel %vm117, %v133, 0.0
    %v139 = vadd.f32 %v137, %v138
    %v140 = vadd.f32 %v128, %v136
    %v141 = vadd.f32 %v129, %v139
    %142 = vst.msk [vmem:[#allocation3] sm:$0xff] %vm117, %v140
    %143 = vst.msk [vmem:[#allocation3 + $0x8] sm:$0xff] %vm117, %v141
    // Predicated region
    $region22: #{tpu_custom_call.1} parent=1 // pred_check
      %p144 = pneg %p94
    $region23: #{tpu_custom_call.1} parent=1 // pred_check_branch
      %146 = sbr.rel (%p144) target = $region25
    $region24: #{tpu_custom_call.1} parent=1 // pred_region
      %v147 = vld [vmem:[#allocation2] sm:$0xff]
      %v148 = vld [vmem:[#allocation2 + $0x8] sm:$0xff]
      %v149 = vsel %vm117, %v147, 0.0
      %v150 = vsel %vm117, %v148, 0.0
      %v151 = vadd.f32 %v149, %v150
      %152 = vadd.xlane.f32.xlu0 %v151
      %v153 = vpop.xlane.xlu0 %152
      %v154 = vrot.slane %v153, 4
      %v155 = vadd.f32 %v153, %v154
      %v156 = vrot.slane %v155, 2
      %v157 = vadd.f32 %v155, %v156
      %v158 = vrot.slane %v157, 1
      %v159 = vadd.f32 %v157, %v158
      %s160 = vtos %v159
      %v161 = vstv %s160
      %v162 = vld [vmem:[#allocation3] sm:$0xff]
      %v163 = vld [vmem:[#allocation3 + $0x8] sm:$0xff]
      %v164 = vsel %vm117, %v162, 0.0
      %v165 = vsel %vm117, %v163, 0.0
      %v166 = vadd.f32 %v164, %v165
      %167 = vadd.xlane.f32.xlu0 %v166
      %v168 = vpop.xlane.xlu0 %167
      %v169 = vrot.slane %v168, 4
      %v170 = vadd.f32 %v168, %v169
      %v171 = vrot.slane %v170, 2
      %v172 = vadd.f32 %v170, %v171
      %v173 = vrot.slane %v172, 1
      %v174 = vadd.f32 %v172, %v173
      %s175 = vtos %v174
      %v176 = vstv %s175
      %v177 = vadd.f32 %v161, 1.0
      %v178 = vadd.f32 %v176, 1.0
      %v179 = vrcp.pop %v178
      %v180 = vmul.f32 %v178, %v179
      %v181 = vsub.f32 1.0, %v180
      %v182 = vmul.f32 %v179, %v181
      %v183 = vadd.f32 %v179, %v182
      %vm184 = vweird.f32 %v178
      %vm185 = vweird.f32 %v179
      %vm186 = vmor %vm184, %vm185
      %v187 = vsel %vm186, %v179, %v183
      %v188 = vand.u32 2147483647, %v178
      %vm189 = vcmp.eq.f32.partialorder %v188, 8.507059e+37
      %v190 = vand.u32 %v178, 2147483648
      %v191 = vor.u32 1.1754944e-38, %v190
      %v192 = vsel %vm189, %v191, %v187
      %v193 = vmul.f32 %v177, %v192
      %v194 = vsub.f32 1.0, %v193
      %vm195 = vcmask 0
      %196 = vst.msk [vmem:[#allocation9] sm:$0x1] %vm195, %v194
    $region25: #{tpu_custom_call.1} parent=1 // pred_fallthru
      _
    // Predicated region
    $region26: #{tpu_custom_call.1} parent=1 // pred_check
      _
    $region27: #{tpu_custom_call.1} parent=1 // pred_check_branch
      %198 = sbr.rel (0) target = $region29
    $region28: #{tpu_custom_call.1} parent=1 // pred_region
      %200 = vsyncadd [#allocation6], 0
      %s202 = sshll.u32 [#allocation9], 4
      %s203 = int_to_ptr.vmem [resolvable:$true] %s202
      %s204 = sshll.u32 %s2, 4
      %s205 = int_to_ptr.hbm [resolvable:$true] %s204
      %207 = dma.vmem_to_hbm [thread:$0]  %s203, 16, %s205, [#allocation6]
    $region29: #{tpu_custom_call.1} parent=1 // pred_fallthru
      _
    // Predicated region
    $region30: #{tpu_custom_call.1} parent=1 // pred_check
      _
    $region31: #{tpu_custom_call.1} parent=1 // pred_check_branch
      %209 = sbr.rel (0) target = $region33
    $region32: #{tpu_custom_call.1} parent=1 // pred_region
      %211 = dma.done [#allocation6], 16
    $region33: #{tpu_custom_call.1} parent=1 // pred_fallthru
      _
    %212 = vsyncpa [#allocation5], 1
    %213 = vsyncpa [#allocation8], 1
    %214 = vsyncpa [#allocation6], 1

</llo_original>
